<compile_context>
chip_gen: v7x
topology: tpu7x:2x2x1
jax: 0.10.0
libtpu: 0.0.40
codegen_flags: <defaults>
</compile_context>

<pallas_src>
import functools

import jax
import jax.numpy as jnp
import numpy as np
from jax import lax
from jax.experimental import pallas as pl
from jax.experimental.pallas import tpu as pltpu


def _cdiv(a, b):
    return -(-a // b)


def _round_up(v, m):
    return ((v + m - 1) // m) * m


def _sublane_multiple(dtype):
    # f32 -> 8, bf16/f16 -> 16, int8/fp8 -> 32 (packed sublane tiles).
    return {4: 8, 2: 16, 1: 32}.get(jnp.dtype(dtype).itemsize, 8)


def _chip_config():
    """Returns (tile_budget_bytes, vmem_limit_bytes, num_tensorcores)."""
    budget, limit, cores = 16 << 20, 32 << 20, 1  # conservative default
    try:
        kind = jax.devices()[0].device_kind.lower()
    except Exception:
        return budget, limit, cores
    if "7" in kind:
        # v7x: 64 MiB VMEM per TC, 2 TCs/chip -> big tiles but hard 48 MiB cap.
        return 28 << 20, 48 << 20, 2
    if "v5e" in kind or "v5 lite" in kind or "v5lite" in kind:
        # v5e: 128 MiB physical VMEM, single TC, ~0.8 TB/s HBM.
        return 12 << 20, 64 << 20, 1
    # v6e (and other >=128 MiB VMEM chips): single TC, plenty of headroom.
    return 24 << 20, 64 << 20, 1


def _cosine_loss_kernel(x_ref, y_ref, o_ref, acc_ref, *,
                        eps, n_rows, block_rows, tiles_per_chunk, two_axis):
    """One (block_rows, D) tile: row-wise cosine, accumulated per row."""
    if two_axis:
        # grid = (core-parallel chunk, reduction over row-tiles in the chunk)
        tile = pl.program_id(0) * tiles_per_chunk + pl.program_id(1)
        j = pl.program_id(1)
        j_last = pl.num_programs(1) - 1
    else:
        # grid = (reduction over row-tiles,)
        tile = pl.program_id(0)
        j = tile
        j_last = pl.num_programs(0) - 1

    @pl.when(j == 0)
    def _():
        acc_ref[...] = jnp.zeros_like(acc_ref)

    x = x_ref[...].astype(jnp.float32)   # (block_rows, D)
    y = y_ref[...].astype(jnp.float32)

    sxy = jnp.sum(x * y, axis=1, keepdims=True)   # (block_rows, 1)
    sxx = jnp.sum(x * x, axis=1, keepdims=True)
    syy = jnp.sum(y * y, axis=1, keepdims=True)
    # cos = sxy / max(||x|| * ||y||, eps).  Two sqrts (EUP slot) instead of
    # rsqrt(sxx*syy): the product of squared norms overflows f32 far earlier
    # than the reference's norm product.
    denom = jnp.maximum(jnp.sqrt(sxx) * jnp.sqrt(syy), eps)
    cos = sxy / denom

    # In-kernel ragged-tail mask (replaces the wrapper jnp.pad): rows beyond
    # the original N (boundary blocks hold unspecified data, and clamped
    # duplicate tiles on the core-parallel path) contribute exactly 0.
    row = tile * block_rows + lax.broadcasted_iota(jnp.int32, cos.shape, 0)
    cos = jnp.where(row < n_rows, cos, 0.0)

    # Row-shaped accumulator: no per-step cross-sublane reduce.
    acc_ref[...] += cos

    @pl.when(j == j_last)
    def _():
        partial = jnp.sum(acc_ref[...])                 # one XLU reduce per chunk
        o_ref[...] = jnp.zeros_like(o_ref) + partial    # lane-dense (8,128) slab


def cosine_loss2(x, y, *, dim=1, eps=1e-8):
    if x.shape != y.shape:
        raise RuntimeError(
            f"Shape of two tensors do not meet. input = {x.shape} while target = {y.shape}"
        )
    if x.ndim != 2 or dim != 1:
        # TODO(synk): general `dim`/rank support needs a wrapper transpose/reshape;
        # the kernel reduces over the last axis of a 2D array.
        raise NotImplementedError("kernel implemented for 2D inputs with dim=1")

    n, d = x.shape
    itemsize = jnp.dtype(x.dtype).itemsize
    sub = _sublane_multiple(x.dtype)
    budget, vmem_limit, cores = _chip_config()

    # Honest per-row VMEM accounting:
    #   * x & y tiles, double-buffered by the pipeline
    #   * f32 upcast copies for sub-32-bit inputs
    #   * elementwise temporaries (x*y, x*x, ...)
    #   * lane-padded (block_rows, 1) f32 accumulator scratch
    per_row = (2 * 2 * d * itemsize
               + (2 * d * 4 if itemsize < 4 else 0)
               + 2 * d * 4
               + 128 * 4)
    row_cap = _round_up(max(_cdiv(n, max(cores, 1)), 1), sub)
    block_rows = max(sub, min(8192, (budget // per_row) // sub * sub, row_cap))

    tiles_total = _cdiv(n, block_rows)
    common = dict(eps=float(eps), n_rows=int(n), block_rows=int(block_rows))

    def run_single_core():
        kernel = functools.partial(_cosine_loss_kernel, two_axis=False,
                                   tiles_per_chunk=int(tiles_total), **common)
        out = pl.pallas_call(
            kernel,
            out_shape=jax.ShapeDtypeStruct((8, 128), jnp.float32),
            grid_spec=pltpu.PrefetchScalarGridSpec(
                num_scalar_prefetch=0,
                grid=(tiles_total,),
                in_specs=[pl.BlockSpec((block_rows, d), lambda j: (j, 0)),
                          pl.BlockSpec((block_rows, d), lambda j: (j, 0))],
                out_specs=pl.BlockSpec((8, 128), lambda j: (0, 0)),
                scratch_shapes=[pltpu.VMEM((block_rows, 1), jnp.float32)],
            ),
            compiler_params=pltpu.CompilerParams(
                dimension_semantics=("arbitrary",),
                vmem_limit_bytes=int(vmem_limit),
            ),
        )(x, y)
        return out[0, 0] / n

    def run_core_parallel():
        p_axis = cores
        tiles_per_chunk = _cdiv(tiles_total, p_axis)

        # Clamp fully-out-of-range tiles to the last valid tile; the in-kernel
        # row mask zeroes their contribution, so no wrapper-side padding.
        def in_map(p, j):
            return (jnp.minimum(p * tiles_per_chunk + j, tiles_total - 1), 0)

        kernel = functools.partial(_cosine_loss_kernel, two_axis=True,
                                   tiles_per_chunk=int(tiles_per_chunk), **common)
        out = pl.pallas_call(
            kernel,
            out_shape=jax.ShapeDtypeStruct((p_axis, 8, 128), jnp.float32),
            grid_spec=pltpu.PrefetchScalarGridSpec(
                num_scalar_prefetch=0,
                grid=(p_axis, tiles_per_chunk),
                in_specs=[pl.BlockSpec((block_rows, d), in_map),
                          pl.BlockSpec((block_rows, d), in_map)],
                out_specs=pl.BlockSpec((1, 8, 128), lambda p, j: (p, 0, 0)),
                scratch_shapes=[pltpu.VMEM((block_rows, 1), jnp.float32)],
            ),
            compiler_params=pltpu.CompilerParams(
                dimension_semantics=(pltpu.CORE_PARALLEL, pltpu.ARBITRARY),
                vmem_limit_bytes=int(vmem_limit),
            ),
        )(x, y)
        return jnp.sum(out[:, 0, 0]) / n

    if cores > 1 and tiles_total >= cores:
        try:
            return run_core_parallel()
        except Exception:
            # CORE_PARALLEL lowering unavailable on this chip/compiler version:
            # fall back to the single-TensorCore 1-D grid (always correct).
            pass
    return run_single_core()


def _reference(x, y, eps=1e-8):
    x = x.astype(jnp.float32)
    y = y.astype(jnp.float32)
    dot = jnp.sum(x * y, axis=1)
    n1 = jnp.sqrt(jnp.sum(x * x, axis=1))
    n2 = jnp.sqrt(jnp.sum(y * y, axis=1))
    return jnp.mean(dot / jnp.maximum(n1 * n2, eps))


if __name__ == "__main__":
    key = jax.random.PRNGKey(0)

    cases = [
        ((100, 128), jnp.float32, 1e-5, 1e-6),   # docstring example, ragged tail
        ((37, 256), jnp.float32, 1e-5, 1e-6),    # small ragged case
        ((50, 128), jnp.bfloat16, 1e-4, 1e-5),   # sub-32-bit sublane path
    ]
    for (N, D), dtype, rtol, atol in cases:
        key, k1, k2 = jax.random.split(key, 3)
        x = jax.random.normal(k1, (N, D), dtype=jnp.float32).astype(dtype)
        y = jax.random.normal(k2, (N, D), dtype=jnp.float32).astype(dtype)

        out = jax.block_until_ready(cosine_loss2(x, y, dim=1, eps=1e-8))
        ref = jax.block_until_ready(_reference(x, y, eps=1e-8))
        assert np.allclose(np.asarray(out), np.asarray(ref), rtol=rtol, atol=atol), (
            N, D, dtype, out, ref)

    print("KERNEL_OK")
</pallas_src>

<mosaic_0001>
module attributes {stable_mosaic.version = 11 : i64} {
  func.func @_cosine_loss_kernel(%arg0: i32, %arg1: memref<104x128xf32, #tpu.memory_space<vmem>>, %arg2: memref<104x128xf32, #tpu.memory_space<vmem>>, %arg3: memref<8x128xf32, #tpu.memory_space<vmem>>, %arg4: memref<104x1xf32, #tpu.memory_space<vmem>>) attributes {dimension_semantics = [#tpu.dimension_semantics<arbitrary>], iteration_bounds = array<i64: 1>, scalar_prefetch = 0 : i64, scratch_operands = 1 : i64, tpu.core_type = #tpu.core_type<tc>, window_params = [{transform_indices = @transform_0, window_bounds = array<i64: 104, 128>}, {transform_indices = @transform_1, window_bounds = array<i64: 104, 128>}, {pipeline_mode = #tpu.pipeline_mode<synchronous>, transform_indices = @transform_2, window_bounds = array<i64: 8, 128>}]} {
    %c0_i32 = arith.constant 0 : i32
    %0 = arith.cmpi eq, %arg0, %c0_i32 : i32
    %1 = arith.extui %0 : i1 to i32
    %c0_i32_0 = arith.constant 0 : i32
    %2 = arith.cmpi ne, %1, %c0_i32_0 : i32
    scf.if %2 {
      %cst_14 = arith.constant 0.000000e+00 : f32
      %34 = vector.broadcast %cst_14 : f32 to vector<104x1xf32>
      %c0_15 = arith.constant 0 : index
      %c0_16 = arith.constant 0 : index
      %35 = vector.load %arg4[%c0_15, %c0_16] : memref<104x1xf32, #tpu.memory_space<vmem>>, vector<104x1xf32>
      tpu.vector_store %arg4[%c0_15, %c0_16], %34 {strides = array<i32>} : memref<104x1xf32, #tpu.memory_space<vmem>>, vector<104x1xf32>,
    } else {
    }
    %c0 = arith.constant 0 : index
    %c0_1 = arith.constant 0 : index
    %3 = vector.load %arg1[%c0, %c0_1] : memref<104x128xf32, #tpu.memory_space<vmem>>, vector<104x128xf32>
    %c0_2 = arith.constant 0 : index
    %c0_3 = arith.constant 0 : index
    %4 = vector.load %arg2[%c0_2, %c0_3] : memref<104x128xf32, #tpu.memory_space<vmem>>, vector<104x128xf32>
    %5 = arith.mulf %3, %4 : vector<104x128xf32>
    %cst = arith.constant dense<0.000000e+00> : vector<104xf32>
    %6 = vector.multi_reduction <add>, %5, %cst [1] : vector<104x128xf32> to vector<104xf32>
    %7 = vector.shape_cast %6 : vector<104xf32> to vector<104x1xf32>
    %8 = arith.mulf %3, %3 : vector<104x128xf32>
    %cst_4 = arith.constant dense<0.000000e+00> : vector<104xf32>
    %9 = vector.multi_reduction <add>, %8, %cst_4 [1] : vector<104x128xf32> to vector<104xf32>
    %10 = vector.shape_cast %9 : vector<104xf32> to vector<104x1xf32>
    %11 = arith.mulf %4, %4 : vector<104x128xf32>
    %cst_5 = arith.constant dense<0.000000e+00> : vector<104xf32>
    %12 = vector.multi_reduction <add>, %11, %cst_5 [1] : vector<104x128xf32> to vector<104xf32>
    %13 = vector.shape_cast %12 : vector<104xf32> to vector<104x1xf32>
    %14 = math.sqrt %10 : vector<104x1xf32>
    %15 = math.sqrt %13 : vector<104x1xf32>
    %16 = arith.mulf %14, %15 : vector<104x1xf32>
    %cst_6 = arith.constant 9.99999993E-9 : f32
    %17 = vector.broadcast %cst_6 : f32 to vector<104x1xf32>
    %18 = arith.maximumf %16, %17 : vector<104x1xf32>
    %19 = arith.divf %7, %18 : vector<104x1xf32>
    %c104_i32 = arith.constant 104 : i32
    %20 = arith.muli %arg0, %c104_i32 : i32
    %21 = tpu.iota {dimensions = array<i32: 0>} : vector<104x1xi32>
    %22 = vector.broadcast %20 : i32 to vector<104x1xi32>
    %23 = arith.addi %22, %21 : vector<104x1xi32>
    %c100_i32 = arith.constant 100 : i32
    %24 = vector.broadcast %c100_i32 : i32 to vector<104x1xi32>
    %25 = arith.cmpi slt, %23, %24 : vector<104x1xi32>
    %cst_7 = arith.constant 0.000000e+00 : f32
    %26 = vector.broadcast %cst_7 : f32 to vector<104x1xf32>
    %27 = arith.select %25, %19, %26 : vector<104x1xi1>, vector<104x1xf32>
    %c0_8 = arith.constant 0 : index
    %c0_9 = arith.constant 0 : index
    %28 = vector.load %arg4[%c0_8, %c0_9] : memref<104x1xf32, #tpu.memory_space<vmem>>, vector<104x1xf32>
    %29 = arith.addf %28, %27 : vector<104x1xf32>
    %c0_10 = arith.constant 0 : index
    %c0_11 = arith.constant 0 : index
    %30 = vector.load %arg4[%c0_10, %c0_11] : memref<104x1xf32, #tpu.memory_space<vmem>>, vector<104x1xf32>
    tpu.vector_store %arg4[%c0_10, %c0_11], %29 {strides = array<i32>} : memref<104x1xf32, #tpu.memory_space<vmem>>, vector<104x1xf32>,
    %c0_i32_12 = arith.constant 0 : i32
    %31 = arith.cmpi eq, %arg0, %c0_i32_12 : i32
    %32 = arith.extui %31 : i1 to i32
    %c0_i32_13 = arith.constant 0 : i32
    %33 = arith.cmpi ne, %32, %c0_i32_13 : i32
    scf.if %33 {
      %c0_14 = arith.constant 0 : index
      %c0_15 = arith.constant 0 : index
      %34 = vector.load %arg4[%c0_14, %c0_15] : memref<104x1xf32, #tpu.memory_space<vmem>>, vector<104x1xf32>
      %35 = vector.shape_cast %34 : vector<104x1xf32> to vector<1x104x1xf32>
      %cst_16 = arith.constant dense<0.000000e+00> : vector<1xf32>
      %36 = vector.multi_reduction <add>, %35, %cst_16 [1, 2] : vector<1x104x1xf32> to vector<1xf32>
      %37 = vector.shape_cast %36 : vector<1xf32> to vector<1x1x1xf32>
      %38 = vector.extract %37[0, 0, 0] : f32 from vector<1x1x1xf32>
      %cst_17 = arith.constant 0.000000e+00 : f32
      %39 = vector.broadcast %cst_17 : f32 to vector<8x128xf32>
      %40 = vector.broadcast %38 : f32 to vector<8x128xf32>
      %41 = arith.addf %39, %40 : vector<8x128xf32>
      %c0_18 = arith.constant 0 : index
      %c0_19 = arith.constant 0 : index
      %42 = vector.load %arg3[%c0_18, %c0_19] : memref<8x128xf32, #tpu.memory_space<vmem>>, vector<8x128xf32>
      tpu.vector_store %arg3[%c0_18, %c0_19], %41 {strides = array<i32>} : memref<8x128xf32, #tpu.memory_space<vmem>>, vector<8x128xf32>,
    } else {
    }
    return
  }
  func.func @transform_0(%arg0: i32) -> (i32, i32) {
    %c0_i32 = arith.constant 0 : i32
    %c0_i32_0 = arith.constant 0 : i32
    return %arg0, %c0_i32 : i32, i32
  }
  func.func @transform_1(%arg0: i32) -> (i32, i32) {
    %c0_i32 = arith.constant 0 : i32
    %c0_i32_0 = arith.constant 0 : i32
    return %arg0, %c0_i32 : i32, i32
  }
  func.func @transform_2(%arg0: i32) -> (i32, i32) {
    %c0_i32 = arith.constant 0 : i32
    %c0_i32_0 = arith.constant 0 : i32
    %c0_i32_1 = arith.constant 0 : i32
    return %c0_i32, %c0_i32_0 : i32, i32
  }
}

</mosaic_0001>

<llo_original>
// kernel: tpu_custom_call.1
$region0: #{tpu_custom_call.1}
  #allocation0 [shape = 'u32[]', space=smem, size = 0x4, offset = 0x4, fixed_abs, tag = 'smem constant byte address 0x4 - core index']
  #allocation1 [shape = 'u32[144,128]{1,0:T(1,128)}', space=vmem, size = 0x12000, scoped, tag = 'internal scratch']
  #allocation2 [shape = 'f32[104,1]{1,0:T(8,128)}', space=vmem, size = 0xd000, scoped, tag = 'scratch operand']
  %s0 = inlined_call_operand.hbm [shape: f32[100,128], index: 0, kind: input, shape index: {}]
  %s1 = inlined_call_operand.hbm [shape: f32[100,128], index: 1, kind: input, shape index: {}]
  %s2 = inlined_call_operand.hbm [shape: f32[8,128], index: 2, kind: output, shape index: {}]
  %s3 = sld [smem:[#allocation0]]
  $region34: #{tpu_custom_call.1} parent=0
    _
  %s5 = ssub.s32 1, %s3
  %s6 = scalar_select 0, %s5, %s3
  $region1: #{tpu_custom_call.1} parent=0
    #allocation3 [shape = 'u8[53248]{0}', space=vmem, size = 0xd000, scoped, tag = 'input window, operand 0, single buffered']
    #allocation4 [shape = 's32[1]{0}', space=sflag, size = 0x4, scoped, tag = 'scoped memory for tpu_custom_call.1']
    #allocation5 [shape = 's32[1]{0}', space=sflag, size = 0x4, scoped, tag = 'scoped memory for tpu_custom_call.1']
    #allocation6 [shape = 'u8[53248]{0}', space=vmem, size = 0xd000, scoped, tag = 'input window, operand 1, single buffered']
    #allocation7 [shape = 's32[1]{0}', space=sflag, size = 0x4, scoped, tag = 'scoped memory for tpu_custom_call.1']
    #allocation8 [shape = 'u8[4096]{0}', space=vmem, size = 0x1000, scoped, tag = 'output window, operand 0, single buffered']
    %7 = vsyncpa [#allocation4], 0
    %8 = vsyncpa [#allocation7], 0
    %9 = vsyncpa [#allocation5], 0
    // Predicated region
    $region2: #{tpu_custom_call.1} parent=1 // pred_check
      _
    $region3: #{tpu_custom_call.1} parent=1 // pred_check_branch
      %11 = sbr.rel (0) target = $region5
    $region4: #{tpu_custom_call.1} parent=1 // pred_region
      %s13 = ssub.s32 1664, 1664
      %14 = vsyncadd [#allocation4], %s13
      %s15 = sshll.u32 [#allocation3], 4
      %s16 = int_to_ptr.vmem [resolvable:$true] %s15
      %21 = dma.hbm_to_vmem [thread:$0]  %s0, 1664, %s16, [#allocation4], 128, 128, 8
    $region5: #{tpu_custom_call.1} parent=1 // pred_fallthru
      _
    // Predicated region
    $region6: #{tpu_custom_call.1} parent=1 // pred_check
      _
    $region7: #{tpu_custom_call.1} parent=1 // pred_check_branch
      %23 = sbr.rel (0) target = $region9
    $region8: #{tpu_custom_call.1} parent=1 // pred_region
      %s25 = ssub.s32 1664, 1664
      %26 = vsyncadd [#allocation7], %s25
      %s27 = sshll.u32 [#allocation6], 4
      %s28 = int_to_ptr.vmem [resolvable:$true] %s27
      %33 = dma.hbm_to_vmem [thread:$0]  %s1, 1664, %s28, [#allocation7], 128, 128, 8
    $region9: #{tpu_custom_call.1} parent=1 // pred_fallthru
      _
    // Predicated region
    $region10: #{tpu_custom_call.1} parent=1 // pred_check
      _
    $region11: #{tpu_custom_call.1} parent=1 // pred_check_branch
      %35 = sbr.rel (0) target = $region13
    $region12: #{tpu_custom_call.1} parent=1 // pred_region
      %36 = dma.done [#allocation4], 1664
    $region13: #{tpu_custom_call.1} parent=1 // pred_fallthru
      _
    // Predicated region
    $region14: #{tpu_custom_call.1} parent=1 // pred_check
      _
    $region15: #{tpu_custom_call.1} parent=1 // pred_check_branch
      %38 = sbr.rel (0) target = $region17
    $region16: #{tpu_custom_call.1} parent=1 // pred_region
      %39 = dma.done [#allocation7], 1664
    $region17: #{tpu_custom_call.1} parent=1 // pred_fallthru
      _
    %p40 = scmp.eq.s32.totalorder 0, 0
    // Predicated region
    $region18: #{tpu_custom_call.1} parent=1 // pred_check
      %p41 = pneg %p40
    $region19: #{tpu_custom_call.1} parent=1 // pred_check_branch
      %43 = sbr.rel (%p41) target = $region21
    $region20: #{tpu_custom_call.1} parent=1 // pred_region
      %vm44 = vcmask 7168
      %45 = vst.msk [vmem:[#allocation2] sm:$0xff] %vm44, 0.0
      %46 = vst.msk [vmem:[#allocation2 + $0x8] sm:$0xff] %vm44, 0.0
      %47 = vst.msk [vmem:[#allocation2 + $0x10] sm:$0xff] %vm44, 0.0
      %48 = vst.msk [vmem:[#allocation2 + $0x18] sm:$0xff] %vm44, 0.0
      %49 = vst.msk [vmem:[#allocation2 + $0x20] sm:$0xff] %vm44, 0.0
      %50 = vst.msk [vmem:[#allocation2 + $0x28] sm:$0xff] %vm44, 0.0
      %51 = vst.msk [vmem:[#allocation2 + $0x30] sm:$0xff] %vm44, 0.0
      %52 = vst.msk [vmem:[#allocation2 + $0x38] sm:$0xff] %vm44, 0.0
      %53 = vst.msk [vmem:[#allocation2 + $0x40] sm:$0xff] %vm44, 0.0
      %54 = vst.msk [vmem:[#allocation2 + $0x48] sm:$0xff] %vm44, 0.0
      %55 = vst.msk [vmem:[#allocation2 + $0x50] sm:$0xff] %vm44, 0.0
      %56 = vst.msk [vmem:[#allocation2 + $0x58] sm:$0xff] %vm44, 0.0
      %57 = vst.msk [vmem:[#allocation2 + $0x60] sm:$0xff] %vm44, 0.0
    $region21: #{tpu_custom_call.1} parent=1 // pred_fallthru
      _
    %v58 = vld [vmem:[#allocation3] sm:$0xff]
    %v59 = vld [vmem:[#allocation3 + $0x8] sm:$0xff]
    %v60 = vld [vmem:[#allocation3 + $0x10] sm:$0xff]
    %v61 = vld [vmem:[#allocation3 + $0x18] sm:$0xff]
    %v62 = vld [vmem:[#allocation3 + $0x20] sm:$0xff]
    %v63 = vld [vmem:[#allocation3 + $0x28] sm:$0xff]
    %v64 = vld [vmem:[#allocation3 + $0x30] sm:$0xff]
    %v65 = vld [vmem:[#allocation3 + $0x38] sm:$0xff]
    %v66 = vld [vmem:[#allocation3 + $0x40] sm:$0xff]
    %v67 = vld [vmem:[#allocation3 + $0x48] sm:$0xff]
    %v68 = vld [vmem:[#allocation3 + $0x50] sm:$0xff]
    %v69 = vld [vmem:[#allocation3 + $0x58] sm:$0xff]
    %v70 = vld [vmem:[#allocation3 + $0x60] sm:$0xff]
    %v71 = vld [vmem:[#allocation6] sm:$0xff]
    %v72 = vld [vmem:[#allocation6 + $0x8] sm:$0xff]
    %v73 = vld [vmem:[#allocation6 + $0x10] sm:$0xff]
    %v74 = vld [vmem:[#allocation6 + $0x18] sm:$0xff]
    %v75 = vld [vmem:[#allocation6 + $0x20] sm:$0xff]
    %v76 = vld [vmem:[#allocation6 + $0x28] sm:$0xff]
    %v77 = vld [vmem:[#allocation6 + $0x30] sm:$0xff]
    %v78 = vld [vmem:[#allocation6 + $0x38] sm:$0xff]
    %v79 = vld [vmem:[#allocation6 + $0x40] sm:$0xff]
    %v80 = vld [vmem:[#allocation6 + $0x48] sm:$0xff]
    %v81 = vld [vmem:[#allocation6 + $0x50] sm:$0xff]
    %v82 = vld [vmem:[#allocation6 + $0x58] sm:$0xff]
    %v83 = vld [vmem:[#allocation6 + $0x60] sm:$0xff]
    %v84 = vmul.f32 %v58, %v71
    %v85 = vmul.f32 %v59, %v72
    %v86 = vmul.f32 %v60, %v73
    %v87 = vmul.f32 %v61, %v74
    %v88 = vmul.f32 %v62, %v75
    %v89 = vmul.f32 %v63, %v76
    %v90 = vmul.f32 %v64, %v77
    %v91 = vmul.f32 %v65, %v78
    %v92 = vmul.f32 %v66, %v79
    %v93 = vmul.f32 %v67, %v80
    %v94 = vmul.f32 %v68, %v81
    %v95 = vmul.f32 %v69, %v82
    %v96 = vmul.f32 %v70, %v83
    %97 = vadd.xlane.f32.xlu0 %v84
    %v98 = vpop.xlane.xlu0 %97
    %99 = vadd.xlane.f32.xlu0 %v85
    %v100 = vpop.xlane.xlu0 %99
    %101 = vadd.xlane.f32.xlu0 %v86
    %v102 = vpop.xlane.xlu0 %101
    %103 = vadd.xlane.f32.xlu0 %v87
    %v104 = vpop.xlane.xlu0 %103
    %105 = vadd.xlane.f32.xlu0 %v88
    %v106 = vpop.xlane.xlu0 %105
    %107 = vadd.xlane.f32.xlu0 %v89
    %v108 = vpop.xlane.xlu0 %107
    %109 = vadd.xlane.f32.xlu0 %v90
    %v110 = vpop.xlane.xlu0 %109
    %111 = vadd.xlane.f32.xlu0 %v91
    %v112 = vpop.xlane.xlu0 %111
    %113 = vadd.xlane.f32.xlu0 %v92
    %v114 = vpop.xlane.xlu0 %113
    %115 = vadd.xlane.f32.xlu0 %v93
    %v116 = vpop.xlane.xlu0 %115
    %117 = vadd.xlane.f32.xlu0 %v94
    %v118 = vpop.xlane.xlu0 %117
    %119 = vadd.xlane.f32.xlu0 %v95
    %v120 = vpop.xlane.xlu0 %119
    %121 = vadd.xlane.f32.xlu0 %v96
    %v122 = vpop.xlane.xlu0 %121
    %v123 = vmul.f32 %v58, %v58
    %v124 = vmul.f32 %v59, %v59
    %v125 = vmul.f32 %v60, %v60
    %v126 = vmul.f32 %v61, %v61
    %v127 = vmul.f32 %v62, %v62
    %v128 = vmul.f32 %v63, %v63
    %v129 = vmul.f32 %v64, %v64
    %v130 = vmul.f32 %v65, %v65
    %v131 = vmul.f32 %v66, %v66
    %v132 = vmul.f32 %v67, %v67
    %v133 = vmul.f32 %v68, %v68
    %v134 = vmul.f32 %v69, %v69
    %v135 = vmul.f32 %v70, %v70
    %136 = vadd.xlane.f32.xlu0 %v123
    %v137 = vpop.xlane.xlu0 %136
    %138 = vadd.xlane.f32.xlu0 %v124
    %v139 = vpop.xlane.xlu0 %138
    %140 = vadd.xlane.f32.xlu0 %v125
    %v141 = vpop.xlane.xlu0 %140
    %142 = vadd.xlane.f32.xlu0 %v126
    %v143 = vpop.xlane.xlu0 %142
    %144 = vadd.xlane.f32.xlu0 %v127
    %v145 = vpop.xlane.xlu0 %144
    %146 = vadd.xlane.f32.xlu0 %v128
    %v147 = vpop.xlane.xlu0 %146
    %148 = vadd.xlane.f32.xlu0 %v129
    %v149 = vpop.xlane.xlu0 %148
    %150 = vadd.xlane.f32.xlu0 %v130
    %v151 = vpop.xlane.xlu0 %150
    %152 = vadd.xlane.f32.xlu0 %v131
    %v153 = vpop.xlane.xlu0 %152
    %154 = vadd.xlane.f32.xlu0 %v132
    %v155 = vpop.xlane.xlu0 %154
    %156 = vadd.xlane.f32.xlu0 %v133
    %v157 = vpop.xlane.xlu0 %156
    %158 = vadd.xlane.f32.xlu0 %v134
    %v159 = vpop.xlane.xlu0 %158
    %160 = vadd.xlane.f32.xlu0 %v135
    %v161 = vpop.xlane.xlu0 %160
    %v162 = vmul.f32 %v71, %v71
    %v163 = vmul.f32 %v72, %v72
    %v164 = vmul.f32 %v73, %v73
    %v165 = vmul.f32 %v74, %v74
    %v166 = vmul.f32 %v75, %v75
    %v167 = vmul.f32 %v76, %v76
    %v168 = vmul.f32 %v77, %v77
    %v169 = vmul.f32 %v78, %v78
    %v170 = vmul.f32 %v79, %v79
    %v171 = vmul.f32 %v80, %v80
    %v172 = vmul.f32 %v81, %v81
    %v173 = vmul.f32 %v82, %v82
    %v174 = vmul.f32 %v83, %v83
    %175 = vadd.xlane.f32.xlu0 %v162
    %v176 = vpop.xlane.xlu0 %175
    %177 = vadd.xlane.f32.xlu0 %v163
    %v178 = vpop.xlane.xlu0 %177
    %179 = vadd.xlane.f32.xlu0 %v164
    %v180 = vpop.xlane.xlu0 %179
    %181 = vadd.xlane.f32.xlu0 %v165
    %v182 = vpop.xlane.xlu0 %181
    %183 = vadd.xlane.f32.xlu0 %v166
    %v184 = vpop.xlane.xlu0 %183
    %185 = vadd.xlane.f32.xlu0 %v167
    %v186 = vpop.xlane.xlu0 %185
    %187 = vadd.xlane.f32.xlu0 %v168
    %v188 = vpop.xlane.xlu0 %187
    %189 = vadd.xlane.f32.xlu0 %v169
    %v190 = vpop.xlane.xlu0 %189
    %191 = vadd.xlane.f32.xlu0 %v170
    %v192 = vpop.xlane.xlu0 %191
    %193 = vadd.xlane.f32.xlu0 %v171
    %v194 = vpop.xlane.xlu0 %193
    %195 = vadd.xlane.f32.xlu0 %v172
    %v196 = vpop.xlane.xlu0 %195
    %197 = vadd.xlane.f32.xlu0 %v173
    %v198 = vpop.xlane.xlu0 %197
    %199 = vadd.xlane.f32.xlu0 %v174
    %v200 = vpop.xlane.xlu0 %199
    %v201 = vrsqrt.pop %v137
    %v202 = vmul.f32 %v137, %v201
    %vm203 = vcmp.eq.f32.partialorder %v137, inf
    %v204 = vsel %vm203, %v137, %v202
    %vm205 = vcmp.eq.f32.partialorder %v137, 0.0
    %v206 = vand.u32 %v137, 2147483648
    %v207 = vsel %vm205, %v206, %v204
    %v208 = vrsqrt.pop %v139
    %v209 = vmul.f32 %v139, %v208
    %vm210 = vcmp.eq.f32.partialorder %v139, inf
    %v211 = vsel %vm210, %v139, %v209
    %vm212 = vcmp.eq.f32.partialorder %v139, 0.0
    %v213 = vand.u32 %v139, 2147483648
    %v214 = vsel %vm212, %v213, %v211
    %v215 = vrsqrt.pop %v141
    %v216 = vmul.f32 %v141, %v215
    %vm217 = vcmp.eq.f32.partialorder %v141, inf
    %v218 = vsel %vm217, %v141, %v216
    %vm219 = vcmp.eq.f32.partialorder %v141, 0.0
    %v220 = vand.u32 %v141, 2147483648
    %v221 = vsel %vm219, %v220, %v218
    %v222 = vrsqrt.pop %v143
    %v223 = vmul.f32 %v143, %v222
    %vm224 = vcmp.eq.f32.partialorder %v143, inf
    %v225 = vsel %vm224, %v143, %v223
    %vm226 = vcmp.eq.f32.partialorder %v143, 0.0
    %v227 = vand.u32 %v143, 2147483648
    %v228 = vsel %vm226, %v227, %v225
    %v229 = vrsqrt.pop %v145
    %v230 = vmul.f32 %v145, %v229
    %vm231 = vcmp.eq.f32.partialorder %v145, inf
    %v232 = vsel %vm231, %v145, %v230
    %vm233 = vcmp.eq.f32.partialorder %v145, 0.0
    %v234 = vand.u32 %v145, 2147483648
    %v235 = vsel %vm233, %v234, %v232
    %v236 = vrsqrt.pop %v147
    %v237 = vmul.f32 %v147, %v236
    %vm238 = vcmp.eq.f32.partialorder %v147, inf
    %v239 = vsel %vm238, %v147, %v237
    %vm240 = vcmp.eq.f32.partialorder %v147, 0.0
    %v241 = vand.u32 %v147, 2147483648
    %v242 = vsel %vm240, %v241, %v239
    %v243 = vrsqrt.pop %v149
    %v244 = vmul.f32 %v149, %v243
    %vm245 = vcmp.eq.f32.partialorder %v149, inf
    %v246 = vsel %vm245, %v149, %v244
    %vm247 = vcmp.eq.f32.partialorder %v149, 0.0
    %v248 = vand.u32 %v149, 2147483648
    %v249 = vsel %vm247, %v248, %v246
    %v250 = vrsqrt.pop %v151
    %v251 = vmul.f32 %v151, %v250
    %vm252 = vcmp.eq.f32.partialorder %v151, inf
    %v253 = vsel %vm252, %v151, %v251
    %vm254 = vcmp.eq.f32.partialorder %v151, 0.0
    %v255 = vand.u32 %v151, 2147483648
    %v256 = vsel %vm254, %v255, %v253
    %v257 = vrsqrt.pop %v153
    %v258 = vmul.f32 %v153, %v257
    %vm259 = vcmp.eq.f32.partialorder %v153, inf
    %v260 = vsel %vm259, %v153, %v258
    %vm261 = vcmp.eq.f32.partialorder %v153, 0.0
    %v262 = vand.u32 %v153, 2147483648
    %v263 = vsel %vm261, %v262, %v260
    %v264 = vrsqrt.pop %v155
    %v265 = vmul.f32 %v155, %v264
    %vm266 = vcmp.eq.f32.partialorder %v155, inf
    %v267 = vsel %vm266, %v155, %v265
    %vm268 = vcmp.eq.f32.partialorder %v155, 0.0
    %v269 = vand.u32 %v155, 2147483648
    %v270 = vsel %vm268, %v269, %v267
    %v271 = vrsqrt.pop %v157
    %v272 = vmul.f32 %v157, %v271
    %vm273 = vcmp.eq.f32.partialorder %v157, inf
    %v274 = vsel %vm273, %v157, %v272
    %vm275 = vcmp.eq.f32.partialorder %v157, 0.0
    %v276 = vand.u32 %v157, 2147483648
    %v277 = vsel %vm275, %v276, %v274
    %v278 = vrsqrt.pop %v159
    %v279 = vmul.f32 %v159, %v278
    %vm280 = vcmp.eq.f32.partialorder %v159, inf
    %v281 = vsel %vm280, %v159, %v279
    %vm282 = vcmp.eq.f32.partialorder %v159, 0.0
    %v283 = vand.u32 %v159, 2147483648
    %v284 = vsel %vm282, %v283, %v281
    %v285 = vrsqrt.pop %v161
    %v286 = vmul.f32 %v161, %v285
    %vm287 = vcmp.eq.f32.partialorder %v161, inf
    %v288 = vsel %vm287, %v161, %v286
    %vm289 = vcmp.eq.f32.partialorder %v161, 0.0
    %v290 = vand.u32 %v161, 2147483648
    %v291 = vsel %vm289, %v290, %v288
    %v292 = vrsqrt.pop %v176
    %v293 = vmul.f32 %v176, %v292
    %vm294 = vcmp.eq.f32.partialorder %v176, inf
    %v295 = vsel %vm294, %v176, %v293
    %vm296 = vcmp.eq.f32.partialorder %v176, 0.0
    %v297 = vand.u32 %v176, 2147483648
    %v298 = vsel %vm296, %v297, %v295
    %v299 = vrsqrt.pop %v178
    %v300 = vmul.f32 %v178, %v299
    %vm301 = vcmp.eq.f32.partialorder %v178, inf
    %v302 = vsel %vm301, %v178, %v300
    %vm303 = vcmp.eq.f32.partialorder %v178, 0.0
    %v304 = vand.u32 %v178, 2147483648
    %v305 = vsel %vm303, %v304, %v302
    %v306 = vrsqrt.pop %v180
    %v307 = vmul.f32 %v180, %v306
    %vm308 = vcmp.eq.f32.partialorder %v180, inf
    %v309 = vsel %vm308, %v180, %v307
    %vm310 = vcmp.eq.f32.partialorder %v180, 0.0
    %v311 = vand.u32 %v180, 2147483648
    %v312 = vsel %vm310, %v311, %v309
    %v313 = vrsqrt.pop %v182
    %v314 = vmul.f32 %v182, %v313
    %vm315 = vcmp.eq.f32.partialorder %v182, inf
    %v316 = vsel %vm315, %v182, %v314
    %vm317 = vcmp.eq.f32.partialorder %v182, 0.0
    %v318 = vand.u32 %v182, 2147483648
    %v319 = vsel %vm317, %v318, %v316
    %v320 = vrsqrt.pop %v184
    %v321 = vmul.f32 %v184, %v320
    %vm322 = vcmp.eq.f32.partialorder %v184, inf
    %v323 = vsel %vm322, %v184, %v321
    %vm324 = vcmp.eq.f32.partialorder %v184, 0.0
    %v325 = vand.u32 %v184, 2147483648
    %v326 = vsel %vm324, %v325, %v323
    %v327 = vrsqrt.pop %v186
    %v328 = vmul.f32 %v186, %v327
    %vm329 = vcmp.eq.f32.partialorder %v186, inf
    %v330 = vsel %vm329, %v186, %v328
    %vm331 = vcmp.eq.f32.partialorder %v186, 0.0
    %v332 = vand.u32 %v186, 2147483648
    %v333 = vsel %vm331, %v332, %v330
    %v334 = vrsqrt.pop %v188
    %v335 = vmul.f32 %v188, %v334
    %vm336 = vcmp.eq.f32.partialorder %v188, inf
    %v337 = vsel %vm336, %v188, %v335
    %vm338 = vcmp.eq.f32.partialorder %v188, 0.0
    %v339 = vand.u32 %v188, 2147483648
    %v340 = vsel %vm338, %v339, %v337
    %v341 = vrsqrt.pop %v190
    %v342 = vmul.f32 %v190, %v341
    %vm343 = vcmp.eq.f32.partialorder %v190, inf
    %v344 = vsel %vm343, %v190, %v342
    %vm345 = vcmp.eq.f32.partialorder %v190, 0.0
    %v346 = vand.u32 %v190, 2147483648
    %v347 = vsel %vm345, %v346, %v344
    %v348 = vrsqrt.pop %v192
    %v349 = vmul.f32 %v192, %v348
    %vm350 = vcmp.eq.f32.partialorder %v192, inf
    %v351 = vsel %vm350, %v192, %v349
    %vm352 = vcmp.eq.f32.partialorder %v192, 0.0
    %v353 = vand.u32 %v192, 2147483648
    %v354 = vsel %vm352, %v353, %v351
    %v355 = vrsqrt.pop %v194
    %v356 = vmul.f32 %v194, %v355
    %vm357 = vcmp.eq.f32.partialorder %v194, inf
    %v358 = vsel %vm357, %v194, %v356
    %vm359 = vcmp.eq.f32.partialorder %v194, 0.0
    %v360 = vand.u32 %v194, 2147483648
    %v361 = vsel %vm359, %v360, %v358
    %v362 = vrsqrt.pop %v196
    %v363 = vmul.f32 %v196, %v362
    %vm364 = vcmp.eq.f32.partialorder %v196, inf
    %v365 = vsel %vm364, %v196, %v363
    %vm366 = vcmp.eq.f32.partialorder %v196, 0.0
    %v367 = vand.u32 %v196, 2147483648
    %v368 = vsel %vm366, %v367, %v365
    %v369 = vrsqrt.pop %v198
    %v370 = vmul.f32 %v198, %v369
    %vm371 = vcmp.eq.f32.partialorder %v198, inf
    %v372 = vsel %vm371, %v198, %v370
    %vm373 = vcmp.eq.f32.partialorder %v198, 0.0
    %v374 = vand.u32 %v198, 2147483648
    %v375 = vsel %vm373, %v374, %v372
    %v376 = vrsqrt.pop %v200
    %v377 = vmul.f32 %v200, %v376
    %vm378 = vcmp.eq.f32.partialorder %v200, inf
    %v379 = vsel %vm378, %v200, %v377
    %vm380 = vcmp.eq.f32.partialorder %v200, 0.0
    %v381 = vand.u32 %v200, 2147483648
    %v382 = vsel %vm380, %v381, %v379
    %v383 = vmul.f32 %v207, %v298
    %v384 = vmul.f32 %v214, %v305
    %v385 = vmul.f32 %v221, %v312
    %v386 = vmul.f32 %v228, %v319
    %v387 = vmul.f32 %v235, %v326
    %v388 = vmul.f32 %v242, %v333
    %v389 = vmul.f32 %v249, %v340
    %v390 = vmul.f32 %v256, %v347
    %v391 = vmul.f32 %v263, %v354
    %v392 = vmul.f32 %v270, %v361
    %v393 = vmul.f32 %v277, %v368
    %v394 = vmul.f32 %v284, %v375
    %v395 = vmul.f32 %v291, %v382
    %v396 = vmax.f32 %v383, 1e-08
    %v397 = vmax.f32 %v384, 1e-08
    %v398 = vmax.f32 %v385, 1e-08
    %v399 = vmax.f32 %v386, 1e-08
    %v400 = vmax.f32 %v387, 1e-08
    %v401 = vmax.f32 %v388, 1e-08
    %v402 = vmax.f32 %v389, 1e-08
    %v403 = vmax.f32 %v390, 1e-08
    %v404 = vmax.f32 %v391, 1e-08
    %v405 = vmax.f32 %v392, 1e-08
    %v406 = vmax.f32 %v393, 1e-08
    %v407 = vmax.f32 %v394, 1e-08
    %v408 = vmax.f32 %v395, 1e-08
    %v409 = vrcp.pop %v396
    %v410 = vmul.f32 %v98, %v409
    %v411 = vrcp.pop %v397
    %v412 = vmul.f32 %v100, %v411
    %v413 = vrcp.pop %v398
    %v414 = vmul.f32 %v102, %v413
    %v415 = vrcp.pop %v399
    %v416 = vmul.f32 %v104, %v415
    %v417 = vrcp.pop %v400
    %v418 = vmul.f32 %v106, %v417
    %v419 = vrcp.pop %v401
    %v420 = vmul.f32 %v108, %v419
    %v421 = vrcp.pop %v402
    %v422 = vmul.f32 %v110, %v421
    %v423 = vrcp.pop %v403
    %v424 = vmul.f32 %v112, %v423
    %v425 = vrcp.pop %v404
    %v426 = vmul.f32 %v114, %v425
    %v427 = vrcp.pop %v405
    %v428 = vmul.f32 %v116, %v427
    %v429 = vrcp.pop %v406
    %v430 = vmul.f32 %v118, %v429
    %v431 = vrcp.pop %v407
    %v432 = vmul.f32 %v120, %v431
    %v433 = vrcp.pop %v408
    %v434 = vmul.f32 %v122, %v433
    %s435 = smul.u32 0, 104
    %v436 = vlaneseq
    %v437 = vshrl.u32 %v436, 7
    %v438 = vadd.s32 %v437, 8
    %v439 = vadd.s32 %v437, 16
    %v440 = vadd.s32 %v437, 24
    %v441 = vadd.s32 %v437, 32
    %v442 = vadd.s32 %v437, 40
    %v443 = vadd.s32 %v437, 48
    %v444 = vadd.s32 %v437, 56
    %v445 = vadd.s32 %v437, 64
    %v446 = vadd.s32 %v437, 72
    %v447 = vadd.s32 %v437, 80
    %v448 = vadd.s32 %v437, 88
    %v449 = vadd.s32 %v437, 96
    %v450 = vstv %s435
    %v451 = vadd.s32 %v450, %v437
    %v452 = vadd.s32 %v450, %v438
    %v453 = vadd.s32 %v450, %v439
    %v454 = vadd.s32 %v450, %v440
    %v455 = vadd.s32 %v450, %v441
    %v456 = vadd.s32 %v450, %v442
    %v457 = vadd.s32 %v450, %v443
    %v458 = vadd.s32 %v450, %v444
    %v459 = vadd.s32 %v450, %v445
    %v460 = vadd.s32 %v450, %v446
    %v461 = vadd.s32 %v450, %v447
    %v462 = vadd.s32 %v450, %v448
    %v463 = vadd.s32 %v450, %v449
    %vm464 = vcmp.lt.s32.totalorder %v451, 100
    %vm465 = vcmp.lt.s32.totalorder %v452, 100
    %vm466 = vcmp.lt.s32.totalorder %v453, 100
    %vm467 = vcmp.lt.s32.totalorder %v454, 100
    %vm468 = vcmp.lt.s32.totalorder %v455, 100
    %vm469 = vcmp.lt.s32.totalorder %v456, 100
    %vm470 = vcmp.lt.s32.totalorder %v457, 100
    %vm471 = vcmp.lt.s32.totalorder %v458, 100
    %vm472 = vcmp.lt.s32.totalorder %v459, 100
    %vm473 = vcmp.lt.s32.totalorder %v460, 100
    %vm474 = vcmp.lt.s32.totalorder %v461, 100
    %vm475 = vcmp.lt.s32.totalorder %v462, 100
    %vm476 = vcmp.lt.s32.totalorder %v463, 100
    %v477 = vsel %vm464, %v410, 0.0
    %v478 = vsel %vm465, %v412, 0.0
    %v479 = vsel %vm466, %v414, 0.0
    %v480 = vsel %vm467, %v416, 0.0
    %v481 = vsel %vm468, %v418, 0.0
    %v482 = vsel %vm469, %v420, 0.0
    %v483 = vsel %vm470, %v422, 0.0
    %v484 = vsel %vm471, %v424, 0.0
    %v485 = vsel %vm472, %v426, 0.0
    %v486 = vsel %vm473, %v428, 0.0
    %v487 = vsel %vm474, %v430, 0.0
    %v488 = vsel %vm475, %v432, 0.0
    %v489 = vsel %vm476, %v434, 0.0
    %v490 = vld [vmem:[#allocation2] sm:$0xff]
    %v491 = vld [vmem:[#allocation2 + $0x8] sm:$0xff]
    %v492 = vld [vmem:[#allocation2 + $0x10] sm:$0xff]
    %v493 = vld [vmem:[#allocation2 + $0x18] sm:$0xff]
    %v494 = vld [vmem:[#allocation2 + $0x20] sm:$0xff]
    %v495 = vld [vmem:[#allocation2 + $0x28] sm:$0xff]
    %v496 = vld [vmem:[#allocation2 + $0x30] sm:$0xff]
    %v497 = vld [vmem:[#allocation2 + $0x38] sm:$0xff]
    %v498 = vld [vmem:[#allocation2 + $0x40] sm:$0xff]
    %v499 = vld [vmem:[#allocation2 + $0x48] sm:$0xff]
    %v500 = vld [vmem:[#allocation2 + $0x50] sm:$0xff]
    %v501 = vld [vmem:[#allocation2 + $0x58] sm:$0xff]
    %v502 = vld [vmem:[#allocation2 + $0x60] sm:$0xff]
    %v503 = vadd.f32 %v490, %v477
    %v504 = vadd.f32 %v491, %v478
    %v505 = vadd.f32 %v492, %v479
    %v506 = vadd.f32 %v493, %v480
    %v507 = vadd.f32 %v494, %v481
    %v508 = vadd.f32 %v495, %v482
    %v509 = vadd.f32 %v496, %v483
    %v510 = vadd.f32 %v497, %v484
    %v511 = vadd.f32 %v498, %v485
    %v512 = vadd.f32 %v499, %v486
    %v513 = vadd.f32 %v500, %v487
    %v514 = vadd.f32 %v501, %v488
    %v515 = vadd.f32 %v502, %v489
    %vm516 = vcmask 7168
    %517 = vst.msk [vmem:[#allocation2] sm:$0xff] %vm516, %v503
    %518 = vst.msk [vmem:[#allocation2 + $0x8] sm:$0xff] %vm516, %v504
    %519 = vst.msk [vmem:[#allocation2 + $0x10] sm:$0xff] %vm516, %v505
    %520 = vst.msk [vmem:[#allocation2 + $0x18] sm:$0xff] %vm516, %v506
    %521 = vst.msk [vmem:[#allocation2 + $0x20] sm:$0xff] %vm516, %v507
    %522 = vst.msk [vmem:[#allocation2 + $0x28] sm:$0xff] %vm516, %v508
    %523 = vst.msk [vmem:[#allocation2 + $0x30] sm:$0xff] %vm516, %v509
    %524 = vst.msk [vmem:[#allocation2 + $0x38] sm:$0xff] %vm516, %v510
    %525 = vst.msk [vmem:[#allocation2 + $0x40] sm:$0xff] %vm516, %v511
    %526 = vst.msk [vmem:[#allocation2 + $0x48] sm:$0xff] %vm516, %v512
    %527 = vst.msk [vmem:[#allocation2 + $0x50] sm:$0xff] %vm516, %v513
    %528 = vst.msk [vmem:[#allocation2 + $0x58] sm:$0xff] %vm516, %v514
    %529 = vst.msk [vmem:[#allocation2 + $0x60] sm:$0xff] %vm516, %v515
    // Predicated region
    $region22: #{tpu_custom_call.1} parent=1 // pred_check
      %p530 = pneg %p40
    $region23: #{tpu_custom_call.1} parent=1 // pred_check_branch
      %532 = sbr.rel (%p530) target = $region25
    $region24: #{tpu_custom_call.1} parent=1 // pred_region
      %v533 = vld [vmem:[#allocation2] sm:$0xff]
      %v534 = vld [vmem:[#allocation2 + $0x8] sm:$0xff]
      %v535 = vld [vmem:[#allocation2 + $0x10] sm:$0xff]
      %v536 = vld [vmem:[#allocation2 + $0x18] sm:$0xff]
      %v537 = vld [vmem:[#allocation2 + $0x20] sm:$0xff]
      %v538 = vld [vmem:[#allocation2 + $0x28] sm:$0xff]
      %v539 = vld [vmem:[#allocation2 + $0x30] sm:$0xff]
      %v540 = vld [vmem:[#allocation2 + $0x38] sm:$0xff]
      %v541 = vld [vmem:[#allocation2 + $0x40] sm:$0xff]
      %v542 = vld [vmem:[#allocation2 + $0x48] sm:$0xff]
      %v543 = vld [vmem:[#allocation2 + $0x50] sm:$0xff]
      %v544 = vld [vmem:[#allocation2 + $0x58] sm:$0xff]
      %v545 = vld [vmem:[#allocation2 + $0x60] sm:$0xff]
      %v546 = vsel %vm516, %v533, 0.0
      %v547 = vsel %vm516, %v534, 0.0
      %v548 = vadd.f32 %v546, %v547
      %v549 = vsel %vm516, %v535, 0.0
      %v550 = vadd.f32 %v548, %v549
      %v551 = vsel %vm516, %v536, 0.0
      %v552 = vadd.f32 %v550, %v551
      %v553 = vsel %vm516, %v537, 0.0
      %v554 = vadd.f32 %v552, %v553
      %v555 = vsel %vm516, %v538, 0.0
      %v556 = vadd.f32 %v554, %v555
      %v557 = vsel %vm516, %v539, 0.0
      %v558 = vadd.f32 %v556, %v557
      %v559 = vsel %vm516, %v540, 0.0
      %v560 = vadd.f32 %v558, %v559
      %v561 = vsel %vm516, %v541, 0.0
      %v562 = vadd.f32 %v560, %v561
      %v563 = vsel %vm516, %v542, 0.0
      %v564 = vadd.f32 %v562, %v563
      %v565 = vsel %vm516, %v543, 0.0
      %v566 = vadd.f32 %v564, %v565
      %v567 = vsel %vm516, %v544, 0.0
      %v568 = vadd.f32 %v566, %v567
      %v569 = vsel %vm516, %v545, 0.0
      %v570 = vadd.f32 %v568, %v569
      %571 = vadd.xlane.f32.xlu0 %v570
      %v572 = vpop.xlane.xlu0 %571
      %v573 = vrot.slane %v572, 4
      %v574 = vadd.f32 %v572, %v573
      %v575 = vrot.slane %v574, 2
      %v576 = vadd.f32 %v574, %v575
      %v577 = vrot.slane %v576, 1
      %v578 = vadd.f32 %v576, %v577
      %s579 = vtos %v578
      %v580 = vstv %s579
      %v581 = vadd.f32 %v580, 0.0
      %582 = vst [vmem:[#allocation8] sm:$0xff] %v581
    $region25: #{tpu_custom_call.1} parent=1 // pred_fallthru
      _
    // Predicated region
    $region26: #{tpu_custom_call.1} parent=1 // pred_check
      _
    $region27: #{tpu_custom_call.1} parent=1 // pred_check_branch
      %584 = sbr.rel (0) target = $region29
    $region28: #{tpu_custom_call.1} parent=1 // pred_region
      %s586 = ssub.s32 128, 128
      %587 = vsyncadd [#allocation5], %s586
      %s589 = sshll.u32 [#allocation8], 4
      %s590 = int_to_ptr.vmem [resolvable:$true] %s589
      %592 = dma.vmem_to_hbm [thread:$0]  %s590, 128, %s2, [#allocation5]
    $region29: #{tpu_custom_call.1} parent=1 // pred_fallthru
      _
    // Predicated region
    $region30: #{tpu_custom_call.1} parent=1 // pred_check
      _
    $region31: #{tpu_custom_call.1} parent=1 // pred_check_branch
      %594 = sbr.rel (0) target = $region33
    $region32: #{tpu_custom_call.1} parent=1 // pred_region
      %595 = dma.done [#allocation5], 128
    $region33: #{tpu_custom_call.1} parent=1 // pred_fallthru
      _
    %596 = vsyncpa [#allocation4], 1
    %597 = vsyncpa [#allocation7], 1
    %598 = vsyncpa [#allocation5], 1

</llo_original>
